<compile_context>
chip_gen: v7x
topology: tpu7x:2x2x1
jax: 0.10.0
libtpu: 0.0.40
codegen_flags: <defaults>
</compile_context>

<pallas_src>
import functools

import jax
import jax.numpy as jnp
from jax import lax
from jax.experimental import pallas as pl
from jax.experimental.pallas import tpu as pltpu


def _round_up(x, m):
    return (x + m - 1) // m * m


# ---------------------------------------------------------------------------
# Hoisted input projection:  (M, K) @ (K, 4H) + bias  ->  (M, 4H)  f32
# ---------------------------------------------------------------------------
def _proj_kernel(x_ref, w_ref, b_ref, o_ref):
    o_ref[...] = (jnp.dot(x_ref[...], w_ref[...],
                          preferred_element_type=jnp.float32)
                  + b_ref[...])


def input_projection(x_2d, w_t, b_row):
    """x_2d (M,K) bf16, w_t (K,N) bf16, b_row (1,N) f32 -> (M,N) f32."""
    M, K = x_2d.shape
    N = w_t.shape[1]
    tm = M
    for cand in (512, 256, 128, 64, 32, 16, 8):
        if cand <= M and M % cand == 0:
            tm = cand
            break
    tn = 512 if N % 512 == 0 else N
    return pl.pallas_call(
        _proj_kernel,
        out_shape=jax.ShapeDtypeStruct((M, N), jnp.float32),
        grid_spec=pltpu.PrefetchScalarGridSpec(
            num_scalar_prefetch=0,
            grid=(M // tm, N // tn),
            in_specs=[
                pl.BlockSpec((tm, K), lambda i, j: (i, 0)),
                pl.BlockSpec((K, tn), lambda i, j: (0, j)),
                pl.BlockSpec((1, tn), lambda i, j: (0, j)),
            ],
            out_specs=pl.BlockSpec((tm, tn), lambda i, j: (i, j)),
        ),
        compiler_params=pltpu.CompilerParams(
            dimension_semantics=("parallel", "parallel")),
    )(x_2d, w_t, b_row)


# ---------------------------------------------------------------------------
# Recurrence kernel: only h_prev @ W_hh inside the time loop.
# ---------------------------------------------------------------------------
def _recurrence_kernel(xg_ref, len_ref, w_hh_ref, y_ref, h_scr, c_scr, *, hp, tc):
    """Grid = (batch_blocks, time_chunks). Time chunk of tc steps per grid step.

    xg_ref:   (tc, bb, 4*hp)  precomputed x@W_ih + b   (f32)
    len_ref:  (bb, 1)         int32 sequence lengths
    w_hh_ref: (hp, 4*hp)      hidden->gates weights    (bf16)
    y_ref:    (tc, bb, hp)    outputs for this chunk
    h_scr/c_scr: (bb, hp) f32 carried state
    """
    c_idx = pl.program_id(1)

    @pl.when(c_idx == 0)
    def _init():
        h_scr[...] = jnp.zeros_like(h_scr)
        c_scr[...] = jnp.zeros_like(c_scr)

    lengths = len_ref[...]                       # (bb, 1) int32

    def step(i, carry):
        t = c_idx * tc + i
        h_prev = h_scr[...]
        c_prev = c_scr[...]
        gates = xg_ref[i] + jnp.dot(h_prev.astype(jnp.bfloat16), w_hh_ref[...],
                                    preferred_element_type=jnp.float32)
        # PyTorch gate order: i, f, g, o — each hp-wide slice is 128-lane aligned.
        i_g = jax.nn.sigmoid(gates[:, 0 * hp:1 * hp])
        f_g = jax.nn.sigmoid(gates[:, 1 * hp:2 * hp])
        g_g = jnp.tanh(gates[:, 2 * hp:3 * hp])
        o_g = jax.nn.sigmoid(gates[:, 3 * hp:4 * hp])
        c_new = f_g * c_prev + i_g * g_g
        h_new = o_g * jnp.tanh(c_new)

        valid = t < lengths                      # (bb, 1) bool
        h_scr[...] = jnp.where(valid, h_new, h_prev)
        c_scr[...] = jnp.where(valid, c_new, c_prev)
        y_ref[i] = jnp.where(valid, h_new, 0.0).astype(y_ref.dtype)
        return carry

    lax.fori_loop(0, tc, step, 0, unroll=True)


def lstm_layer_recurrence(xg, lengths_b1, w_hh_t, hidden_pad, tc, out_dtype):
    Tp, Bp, G = xg.shape
    bb = 16 if Bp % 16 == 0 else Bp
    kernel = functools.partial(_recurrence_kernel, hp=hidden_pad, tc=tc)
    return pl.pallas_call(
        kernel,
        out_shape=jax.ShapeDtypeStruct((Tp, Bp, hidden_pad), out_dtype),
        grid_spec=pltpu.PrefetchScalarGridSpec(
            num_scalar_prefetch=0,
            grid=(Bp // bb, Tp // tc),
            in_specs=[
                pl.BlockSpec((tc, bb, G), lambda b, c: (c, b, 0)),
                pl.BlockSpec((bb, 1), lambda b, c: (b, 0)),
                pl.BlockSpec((hidden_pad, G), lambda b, c: (0, 0)),
            ],
            out_specs=pl.BlockSpec((tc, bb, hidden_pad), lambda b, c: (c, b, 0)),
            scratch_shapes=[pltpu.VMEM((bb, hidden_pad), jnp.float32),   # h carry
                            pltpu.VMEM((bb, hidden_pad), jnp.float32)],  # c carry
        ),
        compiler_params=pltpu.CompilerParams(
            dimension_semantics=("parallel", "arbitrary")),
    )(xg, lengths_b1, w_hh_t)


# ---------------------------------------------------------------------------
# Parameter preparation (padding + layout + bf16 cast)
# ---------------------------------------------------------------------------
def init_lstm_params(key, input_size, hidden_size, num_layers):
    """Raw PyTorch-style params: uniform(-1/sqrt(H), 1/sqrt(H)), f32, unpadded."""
    k = 1.0 / (hidden_size ** 0.5)
    params = []
    for layer in range(num_layers):
        d_in = input_size if layer == 0 else hidden_size
        key, k1, k2, k3, k4 = jax.random.split(key, 5)
        w_ih = jax.random.uniform(k1, (4 * hidden_size, d_in), jnp.float32, -k, k)
        w_hh = jax.random.uniform(k2, (4 * hidden_size, hidden_size), jnp.float32, -k, k)
        b_ih = jax.random.uniform(k3, (4 * hidden_size,), jnp.float32, -k, k)
        b_hh = jax.random.uniform(k4, (4 * hidden_size,), jnp.float32, -k, k)
        params.append((w_ih, w_hh, b_ih, b_hh))
    return params


def prepare_kernel_params(raw_params, hidden_size, hidden_pad):
    """Gate-wise zero-pad H->Hp, transpose, combine biases, cast weights to bf16.

    Zero-padded gate columns make padded hidden units stay exactly 0 (c=0, h=0),
    so padding is numerically transparent.
    """
    H, Hp = hidden_size, hidden_pad
    out = []
    for li, (w_ih, w_hh, b_ih, b_hh) in enumerate(raw_params):
        d_in = w_ih.shape[1]
        d_in_pad = d_in if li == 0 else Hp    # layer>=1 inputs are previous h (padded)

        def pad_gatewise(w, d_pad):
            w4 = w.reshape(4, H, w.shape[1])
            w4 = jnp.pad(w4, ((0, 0), (0, Hp - H), (0, d_pad - w.shape[1])))
            return w4.reshape(4 * Hp, d_pad)

        w_ih_p = pad_gatewise(w_ih, d_in_pad)                 # (4Hp, d_in_pad)
        w_hh_p = pad_gatewise(w_hh, Hp)                       # (4Hp, Hp)
        b = (b_ih + b_hh).reshape(4, H)
        b_p = jnp.pad(b, ((0, 0), (0, Hp - H))).reshape(1, 4 * Hp)
        out.append((w_ih_p.T.astype(jnp.bfloat16),            # (d_in_pad, 4Hp)
                    w_hh_p.T.astype(jnp.bfloat16),            # (Hp, 4Hp)
                    b_p.astype(jnp.float32)))                 # (1, 4Hp)
    return out


# ---------------------------------------------------------------------------
# Forward pass (matches the PyTorch module's forward)
# ---------------------------------------------------------------------------
def lstm_forward(x, input_length, raw_params, hidden_size):
    """x: (B, T, D) batch-first f32. input_length: python list of ints.

    Returns (B, max(input_length), H) f32, zeros past each row's length.
    """
    B, T, D = x.shape
    H = hidden_size
    Hp = _round_up(H, 128)
    Bp = _round_up(max(B, 8), 8)
    t_out = int(max(input_length))
    tc = min(t_out, 16)
    Tp = _round_up(t_out, tc)

    kparams = prepare_kernel_params(raw_params, H, Hp)

    x_tm = jnp.transpose(jnp.asarray(x, jnp.float32), (1, 0, 2))[:t_out]  # (t_out,B,D)
    x_tm = jnp.pad(x_tm, ((0, Tp - t_out), (0, Bp - B), (0, 0)))
    lengths = jnp.asarray(input_length, jnp.int32)
    lengths_b1 = jnp.pad(lengths, (0, Bp - B)).reshape(Bp, 1)   # padded rows: len=0

    h = x_tm.astype(jnp.bfloat16)                  # layer input (Tp, Bp, d_in)
    n_layers = len(kparams)
    for li, (w_ih_t, w_hh_t, b_row) in enumerate(kparams):
        d_in = h.shape[-1]
        xg = input_projection(h.reshape(Tp * Bp, d_in), w_ih_t, b_row)
        xg = xg.reshape(Tp, Bp, 4 * Hp)
        out_dtype = jnp.float32 if li == n_layers - 1 else jnp.bfloat16
        h = lstm_layer_recurrence(xg, lengths_b1, w_hh_t, Hp, tc, out_dtype)

    return jnp.transpose(h[:t_out, :B, :H], (1, 0, 2))          # (B, t_out, H)


# ---------------------------------------------------------------------------
# Pure-JAX reference (f32, unpadded) with identical packed-sequence semantics.
# ---------------------------------------------------------------------------
def lstm_reference(x, input_length, raw_params, hidden_size):
    B, T, D = x.shape
    H = hidden_size
    lengths = jnp.asarray(input_length, jnp.int32)
    y = jnp.asarray(x, jnp.float32)
    for (w_ih, w_hh, b_ih, b_hh) in raw_params:
        w_ih_t, w_hh_t, b = w_ih.T, w_hh.T, (b_ih + b_hh)[None, :]

        def step(carry, inp, w_ih_t=w_ih_t, w_hh_t=w_hh_t, b=b):
            h, c = carry
            x_t, t = inp
            gates = x_t @ w_ih_t + h @ w_hh_t + b
            i = jax.nn.sigmoid(gates[:, :H])
            f = jax.nn.sigmoid(gates[:, H:2 * H])
            g = jnp.tanh(gates[:, 2 * H:3 * H])
            o = jax.nn.sigmoid(gates[:, 3 * H:])
            c_new = f * c + i * g
            h_new = o * jnp.tanh(c_new)
            valid = (t < lengths)[:, None]
            h = jnp.where(valid, h_new, h)
            c = jnp.where(valid, c_new, c)
            return (h, c), jnp.where(valid, h_new, 0.0)

        init = (jnp.zeros((B, H), jnp.float32), jnp.zeros((B, H), jnp.float32))
        _, ys = jax.lax.scan(step, init, (jnp.transpose(y, (1, 0, 2)), jnp.arange(T)))
        y = jnp.transpose(ys, (1, 0, 2))
    return y[:, :int(max(input_length)), :]


if __name__ == "__main__":
    # Small shapes consistent with the module's forward:
    #   input (batch=4, seq=8, input_size=16); hidden_size=32; num_layers=2
    B, T, D, H, L = 4, 8, 16, 32, 2
    key = jax.random.PRNGKey(0)
    key, kx = jax.random.split(key)
    x = jax.random.normal(kx, (B, T, D), jnp.float32)
    input_length = [8, 3, 5, 2]

    raw_params = init_lstm_params(jax.random.PRNGKey(42), D, H, L)

    out = jax.block_until_ready(lstm_forward(x, input_length, raw_params, H))
    ref = jax.block_until_ready(lstm_reference(x, input_length, raw_params, H))

    assert out.shape == (B, max(input_length), H), out.shape
    # bf16 MXU operands vs. pure-f32 reference -> loose tolerance.
    assert jnp.allclose(out, ref, atol=2e-2, rtol=2e-2), (
        f"mismatch vs reference, max abs err = {float(jnp.max(jnp.abs(out - ref)))}")

    print("KERNEL_OK")
</pallas_src>

<mosaic_0001>
module attributes {stable_mosaic.version = 11 : i64} {
  func.func @_proj_kernel(%arg0: i32, %arg1: i32, %arg2: memref<64x16xbf16, #tpu.memory_space<vmem>>, %arg3: memref<16x512xbf16, #tpu.memory_space<vmem>>, %arg4: memref<1x512xf32, #tpu.memory_space<vmem>>, %arg5: memref<64x512xf32, #tpu.memory_space<vmem>>) attributes {dimension_semantics = [#tpu.dimension_semantics<parallel>, #tpu.dimension_semantics<parallel>], iteration_bounds = array<i64: 1, 1>, scalar_prefetch = 0 : i64, scratch_operands = 0 : i64, tpu.core_type = #tpu.core_type<tc>, window_params = [{transform_indices = @transform_0, window_bounds = array<i64: 64, 16>}, {transform_indices = @transform_1, window_bounds = array<i64: 16, 512>}, {transform_indices = @transform_2, window_bounds = array<i64: 1, 512>}, {transform_indices = @transform_3, window_bounds = array<i64: 64, 512>}]} {
    %c0 = arith.constant 0 : index
    %c0_0 = arith.constant 0 : index
    %0 = vector.load %arg2[%c0, %c0_0] : memref<64x16xbf16, #tpu.memory_space<vmem>>, vector<64x16xbf16>
    %c0_1 = arith.constant 0 : index
    %c0_2 = arith.constant 0 : index
    %1 = vector.load %arg3[%c0_1, %c0_2] : memref<16x512xbf16, #tpu.memory_space<vmem>>, vector<16x512xbf16>
    %cst = arith.constant dense<0.000000e+00> : vector<64x512xf32>
    %2 = tpu.matmul %0, %1, %cst {dimension_numbers = #tpu.dot_dimension_numbers<[1], [0], [0], [1], [0, 0, 1, 1], [], []>} : vector<64x16xbf16>, vector<16x512xbf16>, vector<64x512xf32> -> vector<64x512xf32>
    %c0_3 = arith.constant 0 : index
    %c0_4 = arith.constant 0 : index
    %3 = vector.load %arg4[%c0_3, %c0_4] : memref<1x512xf32, #tpu.memory_space<vmem>>, vector<1x512xf32>
    %4 = vector.broadcast %3 : vector<1x512xf32> to vector<64x512xf32>
    %5 = arith.addf %2, %4 : vector<64x512xf32>
    %c0_5 = arith.constant 0 : index
    %c0_6 = arith.constant 0 : index
    %6 = vector.load %arg5[%c0_5, %c0_6] : memref<64x512xf32, #tpu.memory_space<vmem>>, vector<64x512xf32>
    tpu.vector_store %arg5[%c0_5, %c0_6], %5 {strides = array<i32>} : memref<64x512xf32, #tpu.memory_space<vmem>>, vector<64x512xf32>,
    return
  }
  func.func @transform_0(%arg0: i32, %arg1: i32) -> (i32, i32) {
    %c0_i32 = arith.constant 0 : i32
    %c0_i32_0 = arith.constant 0 : i32
    return %arg0, %c0_i32 : i32, i32
  }
  func.func @transform_1(%arg0: i32, %arg1: i32) -> (i32, i32) {
    %c0_i32 = arith.constant 0 : i32
    %c0_i32_0 = arith.constant 0 : i32
    return %c0_i32, %arg1 : i32, i32
  }
  func.func @transform_2(%arg0: i32, %arg1: i32) -> (i32, i32) {
    %c0_i32 = arith.constant 0 : i32
    %c0_i32_0 = arith.constant 0 : i32
    return %c0_i32, %arg1 : i32, i32
  }
  func.func @transform_3(%arg0: i32, %arg1: i32) -> (i32, i32) {
    %c0_i32 = arith.constant 0 : i32
    return %arg0, %arg1 : i32, i32
  }
}

</mosaic_0001>

<llo_original>
// kernel: tpu_custom_call.1
$region0: #{tpu_custom_call.1}
  #allocation0 [shape = 'u32[]', space=smem, size = 0x4, offset = 0x4, fixed_abs, tag = 'smem constant byte address 0x4 - core index']
  #allocation1 [shape = 'u32[144,128]{1,0:T(1,128)}', space=vmem, size = 0x12000, scoped, tag = 'internal scratch']
  %s0 = inlined_call_operand.vmem [shape: bf16[64,16], index: 0, kind: input, shape index: {}]
  %s1 = inlined_call_operand.vmem [shape: bf16[16,512], index: 1, kind: input, shape index: {}]
  %s2 = inlined_call_operand.vmem [shape: f32[1,512], index: 2, kind: input, shape index: {}]
  %s3 = inlined_call_operand.hbm [shape: f32[64,512], index: 3, kind: output, shape index: {}]
  %s4 = sld [smem:[#allocation0]]
  $region22: #{tpu_custom_call.1} parent=0
    _
  %s6 = ssub.s32 1, %s4
  %s7 = scalar_select 0, %s6, %s4
  $region1: #{tpu_custom_call.1} parent=0
    #allocation2 [shape = 'u8[131072]{0}', space=vmem, size = 0x20000, scoped, tag = 'output window, operand 0, single buffered']
    #allocation3 [shape = 's32[1]{0}', space=sflag, size = 0x4, scoped, tag = 'scoped memory for tpu_custom_call.1']
    %8 = vsyncpa [#allocation3], 0
    // Predicated region
    $region2: #{tpu_custom_call.1} parent=1 // pred_check
      _
    $region3: #{tpu_custom_call.1} parent=1 // pred_check_branch
      %10 = sbr.rel (0) target = $region5
    $region4: #{tpu_custom_call.1} parent=1 // pred_region
      _
    $region5: #{tpu_custom_call.1} parent=1 // pred_fallthru
      _
    // Predicated region
    $region6: #{tpu_custom_call.1} parent=1 // pred_check
      _
    $region7: #{tpu_custom_call.1} parent=1 // pred_check_branch
      %12 = sbr.rel (0) target = $region9
    $region8: #{tpu_custom_call.1} parent=1 // pred_region
      _
    $region9: #{tpu_custom_call.1} parent=1 // pred_fallthru
      _
    // Predicated region
    $region10: #{tpu_custom_call.1} parent=1 // pred_check
      _
    $region11: #{tpu_custom_call.1} parent=1 // pred_check_branch
      %14 = sbr.rel (0) target = $region13
    $region12: #{tpu_custom_call.1} parent=1 // pred_region
      _
    $region13: #{tpu_custom_call.1} parent=1 // pred_fallthru
      _
    %v16 = vld [vmem:[%s0] sm:$0xf]
    %v17 = vld [vmem:[%s0 + $0x4] sm:$0xf]
    %v18 = vld [vmem:[%s0 + $0x8] sm:$0xf]
    %v19 = vld [vmem:[%s0 + $0xc] sm:$0xf]
    %v20 = vld [vmem:[%s0 + $0x10] sm:$0xf]
    %v21 = vld [vmem:[%s0 + $0x14] sm:$0xf]
    %v22 = vld [vmem:[%s0 + $0x18] sm:$0xf]
    %v23 = vld [vmem:[%s0 + $0x1c] sm:$0xf]
    %v24 = vld [vmem:[%s1] sm:$0xff]
    %v25 = vld [vmem:[%s1 + $0x8] sm:$0xff]
    %v26 = vld [vmem:[%s1 + $0x10] sm:$0xff]
    %v27 = vld [vmem:[%s1 + $0x18] sm:$0xff]
    %v28 = vld [vmem:[%s2] sm:$0xf]
    %v30 = vlaneseq
    %v31 = vshrl.u32 %v30, 7
    %v32 = vsub.s32 0, %v31
    %v33 = vrot.slane %v28, %v32
    %v34 = vlaneseq
    %v35 = vshrl.u32 %v34, 7
    %v36 = vsub.s32 1, %v35
    %v37 = vrot.slane %v28, %v36
    %v38 = vlaneseq
    %v39 = vshrl.u32 %v38, 7
    %v40 = vsub.s32 2, %v39
    %v41 = vrot.slane %v28, %v40
    %v42 = vlaneseq
    %v43 = vshrl.u32 %v42, 7
    %v44 = vsub.s32 3, %v43
    %v45 = vrot.slane %v28, %v44
    %v58 = vunpack.c.l.b16 %v16
    %v59 = vunpack.c.l.b16 %v17
    %v60 = vunpack.c.l.b16 %v18
    %v61 = vunpack.c.l.b16 %v19
    %v62 = vunpack.c.l.b16 %v20
    %v63 = vunpack.c.l.b16 %v21
    %v64 = vunpack.c.l.b16 %v22
    %v65 = vunpack.c.l.b16 %v23
    %v66 = vpack.c.b16 %v59, %v58
    %v67 = vpack.c.b16 %v61, %v60
    %v68 = vpack.c.b16 %v63, %v62
    %v69 = vpack.c.b16 %v65, %v64
    %v74 = vunpack.c.l.b16 %v24
    %v75 = vunpack.c.h.b16 %v24
    %v76 = vunpack.c.l.b16 %v25
    %v77 = vunpack.c.h.b16 %v25
    %v78 = vunpack.c.l.b16 %v26
    %v79 = vunpack.c.h.b16 %v26
    %v80 = vunpack.c.l.b16 %v27
    %v81 = vunpack.c.h.b16 %v27
    %v82 = vpack.c.b16 %v78, %v74
    %v83 = vpack.c.b16 %v79, %v75
    %v84 = vpack.c.b16 %v80, %v76
    %v85 = vpack.c.b16 %v81, %v77
    %vm90 = vcmask 130048
    %v92 = vsel %vm90, %v66, 0
    %v95 = vsel %vm90, %v67, 0
    %v98 = vsel %vm90, %v68, 0
    %v101 = vsel %vm90, %v69, 0
    %103 = vmatprep.subr.bf16.mxu0 %v83
    %104 = vmatpush1.bf16.msra.mxu0 %v82
    %105 = vmatprep.subr.bf16.mxu0 0
    %106 = vmatpush1.bf16.msra.mxu0 0
    %107 = vmatprep.subr.bf16.mxu0 0
    %108 = vmatpush1.bf16.msra.mxu0 0
    %109 = vmatprep.subr.bf16.mxu0 0
    %110 = vmatpush1.bf16.msra.mxu0 0
    %111 = vmatprep.subr.bf16.mxu0 0
    %112 = vmatpush1.bf16.msra.mxu0 0
    %113 = vmatprep.subr.bf16.mxu0 0
    %114 = vmatpush1.bf16.msra.mxu0 0
    %115 = vmatprep.subr.bf16.mxu0 0
    %116 = vmatpush1.bf16.msra.mxu0 0
    %117 = vmatprep.subr.bf16.mxu0 0
    %118 = vmatpush1.bf16.msra.mxu0 0
    %119 = vmatprep.subr.bf16.mxu0 0
    %120 = vmatpush1.bf16.msra.mxu0 0
    %121 = vmatprep.subr.bf16.mxu0 0
    %122 = vmatpush1.bf16.msra.mxu0 0
    %123 = vmatprep.subr.bf16.mxu0 0
    %124 = vmatpush1.bf16.msra.mxu0 0
    %125 = vmatprep.subr.bf16.mxu0 0
    %126 = vmatpush1.bf16.msra.mxu0 0
    %127 = vmatprep.subr.bf16.mxu0 0
    %128 = vmatpush1.bf16.msra.mxu0 0
    %129 = vmatprep.subr.bf16.mxu0 0
    %130 = vmatpush1.bf16.msra.mxu0 0
    %131 = vmatprep.subr.bf16.mxu0 0
    %132 = vmatpush1.bf16.msra.mxu0 0
    %133 = vmatprep.subr.bf16.mxu0 0
    %134 = vmatpush1.bf16.msra.mxu0 0
    %135 = vmatprep.mubr.bf16.mxu0 0
    %136 = vmatmul.mubr.bf16.gmra.mrb[0].mxu0 %v92
    %v137 = vpop.f32.mrb[0].mxu0
    %v138 = vadd.f32 %v33, %v137
    %v139 = vpop.f32.mrb[0].mxu0
    %v140 = vadd.f32 %v37, %v139
    %v141 = vpop.f32.mrb[0].mxu0
    %v142 = vadd.f32 %v33, %v141
    %v143 = vpop.f32.mrb[0].mxu0
    %v144 = vadd.f32 %v37, %v143
    %145 = vmatprep.mubr.bf16.mxu0 0
    %146 = vmatmul.mubr.bf16.gmra.mrb[0].mxu0 %v95
    %v147 = vpop.f32.mrb[0].mxu0
    %v148 = vadd.f32 %v33, %v147
    %v149 = vpop.f32.mrb[0].mxu0
    %v150 = vadd.f32 %v37, %v149
    %v151 = vpop.f32.mrb[0].mxu0
    %v152 = vadd.f32 %v33, %v151
    %v153 = vpop.f32.mrb[0].mxu0
    %v154 = vadd.f32 %v37, %v153
    %155 = vmatprep.mubr.bf16.mxu0 0
    %156 = vmatmul.mubr.bf16.gmra.mrb[0].mxu0 %v98
    %v157 = vpop.f32.mrb[0].mxu0
    %v158 = vadd.f32 %v33, %v157
    %v159 = vpop.f32.mrb[0].mxu0
    %v160 = vadd.f32 %v37, %v159
    %v161 = vpop.f32.mrb[0].mxu0
    %v162 = vadd.f32 %v33, %v161
    %v163 = vpop.f32.mrb[0].mxu0
    %v164 = vadd.f32 %v37, %v163
    %165 = vmatprep.mubr.bf16.mxu0 0
    %166 = vmatmul.mubr.bf16.gmra.mrb[0].mxu0 %v101
    %v167 = vpop.f32.mrb[0].mxu0
    %v168 = vadd.f32 %v33, %v167
    %v169 = vpop.f32.mrb[0].mxu0
    %v170 = vadd.f32 %v37, %v169
    %v171 = vpop.f32.mrb[0].mxu0
    %v172 = vadd.f32 %v33, %v171
    %v173 = vpop.f32.mrb[0].mxu0
    %v174 = vadd.f32 %v37, %v173
    %175 = vdwg.mxu0
    %176 = vmatprep.subr.bf16.mxu0 %v85
    %177 = vmatpush1.bf16.msra.mxu0 %v84
    %178 = vmatprep.subr.bf16.mxu0 0
    %179 = vmatpush1.bf16.msra.mxu0 0
    %180 = vmatprep.subr.bf16.mxu0 0
    %181 = vmatpush1.bf16.msra.mxu0 0
    %182 = vmatprep.subr.bf16.mxu0 0
    %183 = vmatpush1.bf16.msra.mxu0 0
    %184 = vmatprep.subr.bf16.mxu0 0
    %185 = vmatpush1.bf16.msra.mxu0 0
    %186 = vmatprep.subr.bf16.mxu0 0
    %187 = vmatpush1.bf16.msra.mxu0 0
    %188 = vmatprep.subr.bf16.mxu0 0
    %189 = vmatpush1.bf16.msra.mxu0 0
    %190 = vmatprep.subr.bf16.mxu0 0
    %191 = vmatpush1.bf16.msra.mxu0 0
    %192 = vmatprep.subr.bf16.mxu0 0
    %193 = vmatpush1.bf16.msra.mxu0 0
    %194 = vmatprep.subr.bf16.mxu0 0
    %195 = vmatpush1.bf16.msra.mxu0 0
    %196 = vmatprep.subr.bf16.mxu0 0
    %197 = vmatpush1.bf16.msra.mxu0 0
    %198 = vmatprep.subr.bf16.mxu0 0
    %199 = vmatpush1.bf16.msra.mxu0 0
    %200 = vmatprep.subr.bf16.mxu0 0
    %201 = vmatpush1.bf16.msra.mxu0 0
    %202 = vmatprep.subr.bf16.mxu0 0
    %203 = vmatpush1.bf16.msra.mxu0 0
    %204 = vmatprep.subr.bf16.mxu0 0
    %205 = vmatpush1.bf16.msra.mxu0 0
    %206 = vmatprep.subr.bf16.mxu0 0
    %207 = vmatpush1.bf16.msra.mxu0 0
    %208 = vmatprep.mubr.bf16.mxu0 0
    %209 = vmatmul.mubr.bf16.gmra.mrb[0].mxu0 %v92
    %v210 = vpop.f32.mrb[0].mxu0
    %v211 = vadd.f32 %v41, %v210
    %v212 = vpop.f32.mrb[0].mxu0
    %v213 = vadd.f32 %v45, %v212
    %v214 = vpop.f32.mrb[0].mxu0
    %v215 = vadd.f32 %v41, %v214
    %v216 = vpop.f32.mrb[0].mxu0
    %v217 = vadd.f32 %v45, %v216
    %218 = vmatprep.mubr.bf16.mxu0 0
    %219 = vmatmul.mubr.bf16.gmra.mrb[0].mxu0 %v95
    %v220 = vpop.f32.mrb[0].mxu0
    %v221 = vadd.f32 %v41, %v220
    %v222 = vpop.f32.mrb[0].mxu0
    %v223 = vadd.f32 %v45, %v222
    %v224 = vpop.f32.mrb[0].mxu0
    %v225 = vadd.f32 %v41, %v224
    %v226 = vpop.f32.mrb[0].mxu0
    %v227 = vadd.f32 %v45, %v226
    %228 = vmatprep.mubr.bf16.mxu0 0
    %229 = vmatmul.mubr.bf16.gmra.mrb[0].mxu0 %v98
    %v230 = vpop.f32.mrb[0].mxu0
    %v231 = vadd.f32 %v41, %v230
    %v232 = vpop.f32.mrb[0].mxu0
    %v233 = vadd.f32 %v45, %v232
    %v234 = vpop.f32.mrb[0].mxu0
    %v235 = vadd.f32 %v41, %v234
    %v236 = vpop.f32.mrb[0].mxu0
    %v237 = vadd.f32 %v45, %v236
    %238 = vmatprep.mubr.bf16.mxu0 0
    %239 = vmatmul.mubr.bf16.gmra.mrb[0].mxu0 %v101
    %v240 = vpop.f32.mrb[0].mxu0
    %v241 = vadd.f32 %v41, %v240
    %v242 = vpop.f32.mrb[0].mxu0
    %v243 = vadd.f32 %v45, %v242
    %v244 = vpop.f32.mrb[0].mxu0
    %v245 = vadd.f32 %v41, %v244
    %v246 = vpop.f32.mrb[0].mxu0
    %v247 = vadd.f32 %v45, %v246
    %248 = vdwg.mxu0
    %249 = vst [vmem:[#allocation2] sm:$0xff] %v138
    %250 = vst [vmem:[#allocation2 + $0x8] sm:$0xff] %v140
    %251 = vst [vmem:[#allocation2 + $0x10] sm:$0xff] %v211
    %252 = vst [vmem:[#allocation2 + $0x18] sm:$0xff] %v213
    %253 = vst [vmem:[#allocation2 + $0x20] sm:$0xff] %v142
    %254 = vst [vmem:[#allocation2 + $0x28] sm:$0xff] %v144
    %255 = vst [vmem:[#allocation2 + $0x30] sm:$0xff] %v215
    %256 = vst [vmem:[#allocation2 + $0x38] sm:$0xff] %v217
    %257 = vst [vmem:[#allocation2 + $0x40] sm:$0xff] %v148
    %258 = vst [vmem:[#allocation2 + $0x48] sm:$0xff] %v150
    %259 = vst [vmem:[#allocation2 + $0x50] sm:$0xff] %v221
    %260 = vst [vmem:[#allocation2 + $0x58] sm:$0xff] %v223
    %261 = vst [vmem:[#allocation2 + $0x60] sm:$0xff] %v152
    %262 = vst [vmem:[#allocation2 + $0x68] sm:$0xff] %v154
    %263 = vst [vmem:[#allocation2 + $0x70] sm:$0xff] %v225
    %264 = vst [vmem:[#allocation2 + $0x78] sm:$0xff] %v227
    %265 = vst [vmem:[#allocation2 + $0x80] sm:$0xff] %v158
    %266 = vst [vmem:[#allocation2 + $0x88] sm:$0xff] %v160
    %267 = vst [vmem:[#allocation2 + $0x90] sm:$0xff] %v231
    %268 = vst [vmem:[#allocation2 + $0x98] sm:$0xff] %v233
    %269 = vst [vmem:[#allocation2 + $0xa0] sm:$0xff] %v162
    %270 = vst [vmem:[#allocation2 + $0xa8] sm:$0xff] %v164
    %271 = vst [vmem:[#allocation2 + $0xb0] sm:$0xff] %v235
    %272 = vst [vmem:[#allocation2 + $0xb8] sm:$0xff] %v237
    %273 = vst [vmem:[#allocation2 + $0xc0] sm:$0xff] %v168
    %274 = vst [vmem:[#allocation2 + $0xc8] sm:$0xff] %v170
    %275 = vst [vmem:[#allocation2 + $0xd0] sm:$0xff] %v241
    %276 = vst [vmem:[#allocation2 + $0xd8] sm:$0xff] %v243
    %277 = vst [vmem:[#allocation2 + $0xe0] sm:$0xff] %v172
    %278 = vst [vmem:[#allocation2 + $0xe8] sm:$0xff] %v174
    %279 = vst [vmem:[#allocation2 + $0xf0] sm:$0xff] %v245
    %280 = vst [vmem:[#allocation2 + $0xf8] sm:$0xff] %v247
    // Predicated region
    $region14: #{tpu_custom_call.1} parent=1 // pred_check
      _
    $region15: #{tpu_custom_call.1} parent=1 // pred_check_branch
      %282 = sbr.rel (0) target = $region17
    $region16: #{tpu_custom_call.1} parent=1 // pred_region
      %s284 = ssub.s32 4096, 4096
      %285 = vsyncadd [#allocation3], %s284
      %s286 = sshll.u32 [#allocation2], 4
      %s287 = int_to_ptr.vmem [resolvable:$true] %s286
      %292 = dma.vmem_to_hbm [thread:$0]  %s287, 4096, %s3, [#allocation3], 512, 512, 32
    $region17: #{tpu_custom_call.1} parent=1 // pred_fallthru
      _
    // Predicated region
    $region18: #{tpu_custom_call.1} parent=1 // pred_check
      _
    $region19: #{tpu_custom_call.1} parent=1 // pred_check_branch
      %294 = sbr.rel (0) target = $region21
    $region20: #{tpu_custom_call.1} parent=1 // pred_region
      %295 = dma.done [#allocation3], 4096
    $region21: #{tpu_custom_call.1} parent=1 // pred_fallthru
      _
    %296 = vsyncpa [#allocation3], 1

</llo_original>
